<compile_context>
chip_gen: v5e
topology: v5e:2x2
jax: 0.10.0
libtpu: 0.0.40
codegen_flags: <defaults>
</compile_context>

<pallas_src>
import functools
import math

import jax
import jax.numpy as jnp
from jax import lax
from jax.experimental import pallas as pl
from jax.experimental.pallas import tpu as pltpu


def _round_up(x, m):
    return ((x + m - 1) // m) * m


def _vmem_capacity_bytes():
    try:
        info = pltpu.get_tpu_info()
        cap = getattr(info, "vmem_capacity_bytes", None)
        if cap:
            return int(cap)
    except Exception:
        pass
    return 64 << 20  # conservative default (v7x per-TC VMEM)


def _estimate_vmem_bytes(tb, tc, E, mxu_isz):
    w_tiles = 2 * E * tc * mxu_isz                   # double-buffered (E, tc) weights
    x_tiles = 2 * tb * E * mxu_isz                   # double-buffered (tb, E) x
    lbl_tiles = 2 * ((tb + 7) // 8) * 8 * 128 * 4    # (tb, 1) i32 pads to 128 lanes
    out_tiles = 2 * tb * tc * 4                      # double-buffered f32 output
    temps = 4 * tb * tc * 4                          # f32 logits + margin temporaries
    return w_tiles + x_tiles + lbl_tiles + out_tiles + temps


def _arcface_kernel(hit_ref, x_ref, w_ref, labels_ref, out_ref, *,
                    inv_s, s_cos_m, s_sin_m, tc, num_j):
    j = pl.program_id(0)          # class-tile index (outer grid axis)
    i = pl.program_id(1)          # batch-tile index (inner grid axis)

    # x is already s * x/||x||, w is already w/||w|| (transposed to (E, tc)),
    # so this MXU contraction directly yields s * cos(theta), f32-accumulated.
    logits = lax.dot_general(
        x_ref[...], w_ref[...],
        dimension_numbers=(((1,), (0,)), ((), ())),
        preferred_element_type=jnp.float32)           # (tb, tc)

    tile_has_hit = hit_ref[i * num_j + j] != 0

    @pl.when(jnp.logical_not(tile_has_hit))
    def _():
        # Fast path (vast majority of tiles when C >> B): no margin math.
        out_ref[...] = logits.astype(out_ref.dtype)

    @pl.when(tile_has_hit)
    def _():
        labels = labels_ref[...]                                      # (tb, 1)
        cols = j * tc + lax.broadcasted_iota(jnp.int32, logits.shape, 1)
        hit = labels == cols          # labels == -1 never matches cols >= 0
        # cos(acos(t)+m) with t clamped against fp overshoot; s folded in.
        t = jnp.clip(logits * inv_s, -1.0, 1.0)
        sin_t = jnp.sqrt(jnp.maximum(1.0 - t * t, 0.0))
        adjusted = t * s_cos_m - sin_t * s_sin_m
        out_ref[...] = jnp.where(hit, adjusted, logits).astype(out_ref.dtype)


def arcface_forward(x, weight, labels, *, s=64.0, m=0.5, tc=None, tb=None,
                    mxu_dtype=jnp.bfloat16):
    """ArcFace forward. x: (B, E), weight: (C, E), labels: (B,) int (-1 = skip)."""
    B, E = x.shape
    C, E2 = weight.shape
    assert E == E2
    mxu_isz = jnp.dtype(mxu_dtype).itemsize

    vmem_cap = _vmem_capacity_bytes()
    budget = (vmem_cap * 3) // 4      # headroom below physical VMEM (48 MiB on v7x)

    # ---- tile selection (generation-aware via VMEM capacity) ----
    c_up = max(128, _round_up(C, 128))
    auto_tc = tc is None
    if auto_tc:
        cands = [c for c in (4096, 2048, 1024, 512, 256, 128) if c <= c_up]
        if c_up <= 4096 and c_up not in cands:
            cands.insert(0, c_up)
        tc = 128
        for c in cands:
            if 2 * E * c * mxu_isz <= budget // 3:    # weight double-buffer share
                tc = c
                break
    assert tc % 128 == 0, "class tile must be a multiple of 128 lanes"

    auto_tb = tb is None
    if auto_tb:
        # Prefer a single batch tile so the (E, Cp) weights stream from HBM
        # exactly once; round to 256 MXU rows (v6e/v7x) for large batches.
        tb = _round_up(B, 8)
        if tb >= 256:
            tb = _round_up(tb, 256)
        while tb > 8 and _estimate_vmem_bytes(tb, tc, E, mxu_isz) > budget:
            tb = max(8, _round_up(tb // 2, 8))
    assert tb % 8 == 0 or tb == B
    if auto_tc:
        while _estimate_vmem_bytes(tb, tc, E, mxu_isz) > budget and tc > 128:
            tc = max(128, (tc // 2) // 128 * 128)

    Cp = pl.cdiv(C, tc) * tc
    B_p = pl.cdiv(B, tb) * tb

    # ---- one-time preprocessing in XLA (hoisted out of the kernel) ----
    # rsqrt(max(||.||^2, 1e-24)) == 1 / max(||.||, 1e-12) (matches F.normalize).
    x32 = x.astype(jnp.float32)
    x_inv = lax.rsqrt(jnp.maximum(jnp.sum(x32 * x32, -1, keepdims=True), 1e-24))
    x_s = (x32 * x_inv * s).astype(mxu_dtype)               # s folded into x

    w32 = weight.astype(jnp.float32)
    w_inv = lax.rsqrt(jnp.maximum(jnp.sum(w32 * w32, -1, keepdims=True), 1e-24))
    w_t = (w32 * w_inv).astype(mxu_dtype).T                  # (E, C), normalized

    labels_i = labels.reshape(-1).astype(jnp.int32)
    if Cp != C:
        w_t = jnp.pad(w_t, ((0, 0), (0, Cp - C)))            # zero cols -> zero logits
    if B_p != B:
        x_s = jnp.pad(x_s, ((0, B_p - B), (0, 0)))
        labels_i = jnp.pad(labels_i, (0, B_p - B), constant_values=-1)
    labels2d = labels_i.reshape(B_p, 1)

    num_i = B_p // tb
    num_j = Cp // tc

    # Per-(batch-tile, class-tile) "has a label hit" table -> SMEM via scalar
    # prefetch; lets the kernel skip the whole margin epilogue on miss tiles.
    lab_tiles = labels_i.reshape(num_i, tb)
    tile_of_lab = jnp.where(lab_tiles >= 0, lab_tiles // tc, -1)
    hit_tbl = (tile_of_lab[:, :, None] ==
               jnp.arange(num_j, dtype=jnp.int32)[None, None, :]).any(axis=1)
    hit_flat = hit_tbl.astype(jnp.int32).reshape(-1)          # (num_i * num_j,)

    est_vmem = _estimate_vmem_bytes(tb, tc, E, mxu_isz)
    vmem_limit = int(min(vmem_cap, max(2 * est_vmem, 16 << 20)))

    kernel = functools.partial(
        _arcface_kernel,
        inv_s=1.0 / float(s),
        s_cos_m=float(s) * math.cos(m),
        s_sin_m=float(s) * math.sin(m),
        tc=tc, num_j=num_j)

    out = pl.pallas_call(
        kernel,
        out_shape=jax.ShapeDtypeStruct((B_p, Cp), jnp.float32),
        grid_spec=pltpu.PrefetchScalarGridSpec(
            num_scalar_prefetch=1,
            # Class tiles OUTER, batch tiles INNER: the weight block index is
            # constant along the inner loop, so each (E, tc) weight tile is
            # DMA'd from HBM exactly once for the whole batch.
            grid=(num_j, num_i),
            in_specs=[
                pl.BlockSpec((tb, E), lambda j, i, hit: (i, 0)),   # s * x/||x||
                pl.BlockSpec((E, tc), lambda j, i, hit: (0, j)),   # normalized w^T
                pl.BlockSpec((tb, 1), lambda j, i, hit: (i, 0)),   # labels
            ],
            out_specs=pl.BlockSpec((tb, tc), lambda j, i, hit: (i, j)),
        ),
        compiler_params=pltpu.CompilerParams(
            dimension_semantics=("parallel", "parallel"),
            vmem_limit_bytes=vmem_limit),
    )(hit_flat, x_s, w_t, labels2d)

    if B_p != B or Cp != C:
        out = out[:B, :C]
    return out


def arcface_reference(x, weight, labels, *, s=64.0, m=0.5):
    """Pure-JAX reference matching the PyTorch forward."""
    xn = x / jnp.maximum(jnp.linalg.norm(x, axis=-1, keepdims=True), 1e-12)
    wn = weight / jnp.maximum(
        jnp.linalg.norm(weight, axis=-1, keepdims=True), 1e-12)
    logits = xn @ wn.T
    cols = jnp.arange(weight.shape[0])[None, :]
    hit = (labels[:, None] == cols) & (labels[:, None] != -1)
    # Clamp before arccos so fp overshoot past +/-1 doesn't make the ref NaN.
    adjusted = jnp.cos(jnp.arccos(jnp.clip(logits, -1.0, 1.0)) + m)
    return s * jnp.where(hit, adjusted, logits)


if __name__ == "__main__":
    s_val, m_val = 64.0, 0.5
    key = jax.random.PRNGKey(0)
    kx, kw, kl = jax.random.split(key, 3)

    # --- config 1: aligned shapes, single tile ---
    B, E, C = 8, 128, 256
    x = jax.random.normal(kx, (B, E), dtype=jnp.float32)
    weight = jax.random.normal(kw, (C, E), dtype=jnp.float32) * 0.01
    labels = jax.random.randint(kl, (B,), 0, C, dtype=jnp.int32)
    labels = labels.at[1].set(-1)                       # exercise the "skip" path

    ref = arcface_reference(x, weight, labels, s=s_val, m=m_val)

    out_f32 = jax.block_until_ready(
        arcface_forward(x, weight, labels, s=s_val, m=m_val,
                        mxu_dtype=jnp.float32))
    assert out_f32.shape == (B, C)
    assert jnp.allclose(out_f32, ref, atol=2e-3, rtol=2e-3)

    out_bf16 = jax.block_until_ready(
        arcface_forward(x, weight, labels, s=s_val, m=m_val))
    assert out_bf16.shape == (B, C)
    assert jnp.allclose(out_bf16, ref, atol=1.0, rtol=2e-2)

    # --- config 2: ragged shapes (batch & class padding, multiple class tiles,
    #     tiles with no label hit take the gated fast path) ---
    B2, E2, C2 = 12, 128, 300
    x2 = jax.random.normal(kx, (B2, E2), dtype=jnp.float32)
    w2 = jax.random.normal(kw, (C2, E2), dtype=jnp.float32) * 0.01
    l2 = jax.random.randint(kl, (B2,), 0, C2, dtype=jnp.int32).at[0].set(-1)
    ref2 = arcface_reference(x2, w2, l2, s=s_val, m=m_val)
    out2 = jax.block_until_ready(
        arcface_forward(x2, w2, l2, s=s_val, m=m_val,
                        mxu_dtype=jnp.float32, tc=128))
    assert out2.shape == (B2, C2)
    assert jnp.allclose(out2, ref2, atol=2e-3, rtol=2e-3)

    print("KERNEL_OK")
</pallas_src>

<mosaic_0001>
module attributes {stable_mosaic.version = 11 : i64} {
  func.func @_arcface_kernel(%arg0: i32, %arg1: i32, %arg2: memref<1xi32, #tpu.memory_space<smem>>, %arg3: memref<8x128xf32, #tpu.memory_space<vmem>>, %arg4: memref<128x256xf32, #tpu.memory_space<vmem>>, %arg5: memref<8x1xi32, #tpu.memory_space<vmem>>, %arg6: memref<8x256xf32, #tpu.memory_space<vmem>>) attributes {dimension_semantics = [#tpu.dimension_semantics<parallel>, #tpu.dimension_semantics<parallel>], iteration_bounds = array<i64: 1, 1>, scalar_prefetch = 1 : i64, scratch_operands = 0 : i64, tpu.core_type = #tpu.core_type<tc>, window_params = [{transform_indices = @transform_0, window_bounds = array<i64: 8, 128>}, {transform_indices = @transform_1, window_bounds = array<i64: 128, 256>}, {transform_indices = @transform_2, window_bounds = array<i64: 8, 1>}, {transform_indices = @transform_3, window_bounds = array<i64: 8, 256>}]} {
    %c0 = arith.constant 0 : index
    %c0_0 = arith.constant 0 : index
    %0 = vector.load %arg3[%c0, %c0_0] : memref<8x128xf32, #tpu.memory_space<vmem>>, vector<8x128xf32>
    %c0_1 = arith.constant 0 : index
    %c0_2 = arith.constant 0 : index
    %1 = vector.load %arg4[%c0_1, %c0_2] : memref<128x256xf32, #tpu.memory_space<vmem>>, vector<128x256xf32>
    %cst = arith.constant dense<0.000000e+00> : vector<8x256xf32>
    %2 = tpu.matmul %0, %1, %cst {dimension_numbers = #tpu.dot_dimension_numbers<[1], [0], [0], [1], [0, 0, 1, 1], [], []>} : vector<8x128xf32>, vector<128x256xf32>, vector<8x256xf32> -> vector<8x256xf32>
    %c1_i32 = arith.constant 1 : i32
    %3 = arith.muli %arg1, %c1_i32 : i32
    %4 = arith.addi %3, %arg0 : i32
    %5 = arith.index_cast %4 : i32 to index
    %6 = memref.load %arg2[%5] : memref<1xi32, #tpu.memory_space<smem>>
    %c0_i32 = arith.constant 0 : i32
    %7 = arith.cmpi ne, %6, %c0_i32 : i32
    %true = arith.constant true
    %8 = arith.xori %7, %true : i1
    %9 = arith.extui %8 : i1 to i32
    %c0_i32_3 = arith.constant 0 : i32
    %10 = arith.cmpi ne, %9, %c0_i32_3 : i32
    scf.if %10 {
      %c0_5 = arith.constant 0 : index
      %c0_6 = arith.constant 0 : index
      %13 = vector.load %arg6[%c0_5, %c0_6] : memref<8x256xf32, #tpu.memory_space<vmem>>, vector<8x256xf32>
      tpu.vector_store %arg6[%c0_5, %c0_6], %2 {strides = array<i32>} : memref<8x256xf32, #tpu.memory_space<vmem>>, vector<8x256xf32>,
    } else {
    }
    %11 = arith.extui %7 : i1 to i32
    %c0_i32_4 = arith.constant 0 : i32
    %12 = arith.cmpi ne, %11, %c0_i32_4 : i32
    scf.if %12 {
      %c0_5 = arith.constant 0 : index
      %c0_6 = arith.constant 0 : index
      %13 = vector.load %arg5[%c0_5, %c0_6] : memref<8x1xi32, #tpu.memory_space<vmem>>, vector<8x1xi32>
      %c256_i32 = arith.constant 256 : i32
      %14 = arith.muli %arg0, %c256_i32 : i32
      %15 = tpu.iota {dimensions = array<i32: 1>} : vector<8x256xi32>
      %16 = vector.broadcast %14 : i32 to vector<8x256xi32>
      %17 = arith.addi %16, %15 : vector<8x256xi32>
      %18 = vector.broadcast %13 : vector<8x1xi32> to vector<8x256xi32>
      %19 = arith.cmpi eq, %18, %17 : vector<8x256xi32>
      %cst_7 = arith.constant 1.562500e-02 : f32
      %20 = vector.broadcast %cst_7 : f32 to vector<8x256xf32>
      %21 = arith.mulf %2, %20 : vector<8x256xf32>
      %cst_8 = arith.constant -1.000000e+00 : f32
      %cst_9 = arith.constant 1.000000e+00 : f32
      %22 = vector.broadcast %cst_8 : f32 to vector<8x256xf32>
      %23 = arith.maximumf %22, %21 : vector<8x256xf32>
      %24 = vector.broadcast %cst_9 : f32 to vector<8x256xf32>
      %25 = arith.minimumf %24, %23 : vector<8x256xf32>
      %26 = arith.mulf %25, %25 : vector<8x256xf32>
      %cst_10 = arith.constant 1.000000e+00 : f32
      %27 = vector.broadcast %cst_10 : f32 to vector<8x256xf32>
      %28 = arith.subf %27, %26 : vector<8x256xf32>
      %cst_11 = arith.constant 0.000000e+00 : f32
      %29 = vector.broadcast %cst_11 : f32 to vector<8x256xf32>
      %30 = arith.maximumf %28, %29 : vector<8x256xf32>
      %31 = math.sqrt %30 : vector<8x256xf32>
      %cst_12 = arith.constant 56.1652832 : f32
      %32 = vector.broadcast %cst_12 : f32 to vector<8x256xf32>
      %33 = arith.mulf %25, %32 : vector<8x256xf32>
      %cst_13 = arith.constant 30.6832352 : f32
      %34 = vector.broadcast %cst_13 : f32 to vector<8x256xf32>
      %35 = arith.mulf %31, %34 : vector<8x256xf32>
      %36 = arith.subf %33, %35 : vector<8x256xf32>
      %37 = arith.select %19, %36, %2 : vector<8x256xi1>, vector<8x256xf32>
      %c0_14 = arith.constant 0 : index
      %c0_15 = arith.constant 0 : index
      %38 = vector.load %arg6[%c0_14, %c0_15] : memref<8x256xf32, #tpu.memory_space<vmem>>, vector<8x256xf32>
      tpu.vector_store %arg6[%c0_14, %c0_15], %37 {strides = array<i32>} : memref<8x256xf32, #tpu.memory_space<vmem>>, vector<8x256xf32>,
    } else {
    }
    return
  }
  func.func @transform_0(%arg0: i32, %arg1: i32, %arg2: memref<1xi32, #tpu.memory_space<smem>>) -> (i32, i32) {
    %c0_i32 = arith.constant 0 : i32
    %c0_i32_0 = arith.constant 0 : i32
    return %arg1, %c0_i32 : i32, i32
  }
  func.func @transform_1(%arg0: i32, %arg1: i32, %arg2: memref<1xi32, #tpu.memory_space<smem>>) -> (i32, i32) {
    %c0_i32 = arith.constant 0 : i32
    %c0_i32_0 = arith.constant 0 : i32
    return %c0_i32, %arg0 : i32, i32
  }
  func.func @transform_2(%arg0: i32, %arg1: i32, %arg2: memref<1xi32, #tpu.memory_space<smem>>) -> (i32, i32) {
    %c0_i32 = arith.constant 0 : i32
    %c0_i32_0 = arith.constant 0 : i32
    return %arg1, %c0_i32 : i32, i32
  }
  func.func @transform_3(%arg0: i32, %arg1: i32, %arg2: memref<1xi32, #tpu.memory_space<smem>>) -> (i32, i32) {
    %c0_i32 = arith.constant 0 : i32
    return %arg1, %arg0 : i32, i32
  }
}

</mosaic_0001>

<llo_original>
// kernel: tpu_custom_call.1
$region0: #{tpu_custom_call.1}
  #allocation0 [shape = 'u32[]', space=smem, size = 0x4, offset = 0x4, fixed_abs, tag = 'smem constant byte address 0x4 - core index']
  #allocation1 [shape = 'u32[72,128]{1,0:T(1,128)}', space=vmem, size = 0x9000, scoped, tag = 'internal scratch']
  #allocation2 [shape = 's32[1]{0}', space=sflag, size = 0x4, scoped, tag = 'scoped memory for tpu_custom_call.1']
  #allocation3 [shape = 's32[1]{0:T(128)S(6)}', space=smem, size = 0x200, scoped, tag = 'prefetched SMEM operand 0']
  %s0 = inlined_call_operand.<no memory space> [shape: s32[1], index: 0, kind: input, shape index: {}]
  %s1 = inlined_call_operand.vmem [shape: f32[8,128], index: 1, kind: input, shape index: {}]
  %s2 = inlined_call_operand.hbm [shape: f32[128,256], index: 2, kind: input, shape index: {}]
  %s3 = inlined_call_operand.vmem [shape: s32[8,1], index: 3, kind: input, shape index: {}]
  %s4 = inlined_call_operand.hbm [shape: f32[8,256], index: 4, kind: output, shape index: {}]
  %s5 = sld [smem:[#allocation0]]
  $region34: #{tpu_custom_call.1} parent=0
    _
  %s7 = ssub.s32 1, %s5
  %s8 = scalar_select 0, %s7, %s5
  %9 = sst [smem:[#allocation3]] %s0
  $region1: #{tpu_custom_call.1} parent=0
    #allocation4 [shape = 'u8[131072]{0}', space=vmem, size = 0x20000, scoped, tag = 'input window, operand 2, single buffered']
    #allocation5 [shape = 's32[1]{0}', space=sflag, size = 0x4, scoped, tag = 'scoped memory for tpu_custom_call.1']
    #allocation6 [shape = 's32[1]{0}', space=sflag, size = 0x4, scoped, tag = 'scoped memory for tpu_custom_call.1']
    #allocation7 [shape = 'u8[8192]{0}', space=vmem, size = 0x2000, scoped, tag = 'output window, operand 0, single buffered']
    %10 = vsyncpa [#allocation5], 0
    %11 = vsyncpa [#allocation6], 0
    // Predicated region
    $region2: #{tpu_custom_call.1} parent=1 // pred_check
      _
    $region3: #{tpu_custom_call.1} parent=1 // pred_check_branch
      %13 = sbr.rel (0) target = $region5
    $region4: #{tpu_custom_call.1} parent=1 // pred_region
      _
    $region5: #{tpu_custom_call.1} parent=1 // pred_fallthru
      _
    // Predicated region
    $region6: #{tpu_custom_call.1} parent=1 // pred_check
      _
    $region7: #{tpu_custom_call.1} parent=1 // pred_check_branch
      %15 = sbr.rel (0) target = $region9
    $region8: #{tpu_custom_call.1} parent=1 // pred_region
      %17 = vsyncadd [#allocation5], 0
      %s18 = sshll.u32 %s2, 4
      %s19 = int_to_ptr.hbm [resolvable:$true] %s18
      %s20 = sshll.u32 [#allocation4], 4
      %s21 = int_to_ptr.vmem [resolvable:$true] %s20
      %26 = dma.hbm_to_vmem [thread:$0]  %s19, 4096, %s21, [#allocation5], 256, 256, 16
    $region9: #{tpu_custom_call.1} parent=1 // pred_fallthru
      _
    // Predicated region
    $region10: #{tpu_custom_call.1} parent=1 // pred_check
      _
    $region11: #{tpu_custom_call.1} parent=1 // pred_check_branch
      %28 = sbr.rel (0) target = $region13
    $region12: #{tpu_custom_call.1} parent=1 // pred_region
      _
    $region13: #{tpu_custom_call.1} parent=1 // pred_fallthru
      _
    // Predicated region
    $region14: #{tpu_custom_call.1} parent=1 // pred_check
      _
    $region15: #{tpu_custom_call.1} parent=1 // pred_check_branch
      %30 = sbr.rel (0) target = $region17
    $region16: #{tpu_custom_call.1} parent=1 // pred_region
      %32 = dma.done [#allocation5], 4096
    $region17: #{tpu_custom_call.1} parent=1 // pred_fallthru
      _
    %v33 = vld [vmem:[%s1] sm:$0xff]
    %v34 = vld [vmem:[#allocation4] sm:$0xff]
    %v35 = vld [vmem:[#allocation4 + $0x8] sm:$0xff]
    %v36 = vld [vmem:[#allocation4 + $0x10] sm:$0xff]
    %v37 = vld [vmem:[#allocation4 + $0x18] sm:$0xff]
    %v38 = vld [vmem:[#allocation4 + $0x20] sm:$0xff]
    %v39 = vld [vmem:[#allocation4 + $0x28] sm:$0xff]
    %v40 = vld [vmem:[#allocation4 + $0x30] sm:$0xff]
    %v41 = vld [vmem:[#allocation4 + $0x38] sm:$0xff]
    %v42 = vld [vmem:[#allocation4 + $0x40] sm:$0xff]
    %v43 = vld [vmem:[#allocation4 + $0x48] sm:$0xff]
    %v44 = vld [vmem:[#allocation4 + $0x50] sm:$0xff]
    %v45 = vld [vmem:[#allocation4 + $0x58] sm:$0xff]
    %v46 = vld [vmem:[#allocation4 + $0x60] sm:$0xff]
    %v47 = vld [vmem:[#allocation4 + $0x68] sm:$0xff]
    %v48 = vld [vmem:[#allocation4 + $0x70] sm:$0xff]
    %v49 = vld [vmem:[#allocation4 + $0x78] sm:$0xff]
    %v50 = vld [vmem:[#allocation4 + $0x80] sm:$0xff]
    %v51 = vld [vmem:[#allocation4 + $0x88] sm:$0xff]
    %v52 = vld [vmem:[#allocation4 + $0x90] sm:$0xff]
    %v53 = vld [vmem:[#allocation4 + $0x98] sm:$0xff]
    %v54 = vld [vmem:[#allocation4 + $0xa0] sm:$0xff]
    %v55 = vld [vmem:[#allocation4 + $0xa8] sm:$0xff]
    %v56 = vld [vmem:[#allocation4 + $0xb0] sm:$0xff]
    %v57 = vld [vmem:[#allocation4 + $0xb8] sm:$0xff]
    %v58 = vld [vmem:[#allocation4 + $0xc0] sm:$0xff]
    %v59 = vld [vmem:[#allocation4 + $0xc8] sm:$0xff]
    %v60 = vld [vmem:[#allocation4 + $0xd0] sm:$0xff]
    %v61 = vld [vmem:[#allocation4 + $0xd8] sm:$0xff]
    %v62 = vld [vmem:[#allocation4 + $0xe0] sm:$0xff]
    %v63 = vld [vmem:[#allocation4 + $0xe8] sm:$0xff]
    %v64 = vld [vmem:[#allocation4 + $0xf0] sm:$0xff]
    %v65 = vld [vmem:[#allocation4 + $0xf8] sm:$0xff]
    %66 = vmatpush.msra.mxu0 %v64
    %67 = vmatpush.msra.mxu0 %v62
    %68 = vmatpush.msra.mxu0 %v60
    %69 = vmatpush.msra.mxu0 %v58
    %70 = vmatpush.msra.mxu0 %v56
    %71 = vmatpush.msra.mxu0 %v54
    %72 = vmatpush.msra.mxu0 %v52
    %73 = vmatpush.msra.mxu0 %v50
    %74 = vmatpush.msra.mxu0 %v48
    %75 = vmatpush.msra.mxu0 %v46
    %76 = vmatpush.msra.mxu0 %v44
    %77 = vmatpush.msra.mxu0 %v42
    %78 = vmatpush.msra.mxu0 %v40
    %79 = vmatpush.msra.mxu0 %v38
    %80 = vmatpush.msra.mxu0 %v36
    %81 = vmatpush.msra.mxu0 %v34
    %82 = vmatmul.f32.gmra.mxu0 %v33
    %v83 = vpop.f32.mrf.mxu0
    %v84 = vadd.f32 0.0, %v83
    %85 = vdwg.mxu0
    %86 = vmatpush.msra.mxu0 %v65
    %87 = vmatpush.msra.mxu0 %v63
    %88 = vmatpush.msra.mxu0 %v61
    %89 = vmatpush.msra.mxu0 %v59
    %90 = vmatpush.msra.mxu0 %v57
    %91 = vmatpush.msra.mxu0 %v55
    %92 = vmatpush.msra.mxu0 %v53
    %93 = vmatpush.msra.mxu0 %v51
    %94 = vmatpush.msra.mxu0 %v49
    %95 = vmatpush.msra.mxu0 %v47
    %96 = vmatpush.msra.mxu0 %v45
    %97 = vmatpush.msra.mxu0 %v43
    %98 = vmatpush.msra.mxu0 %v41
    %99 = vmatpush.msra.mxu0 %v39
    %100 = vmatpush.msra.mxu0 %v37
    %101 = vmatpush.msra.mxu0 %v35
    %102 = vmatmul.f32.gmra.mxu0 %v33
    %v103 = vpop.f32.mrf.mxu0
    %v104 = vadd.f32 0.0, %v103
    %105 = vdwg.mxu0
    %s106 = sadd.s32 0, 0
    %s107 = sld [smem:[#allocation3 + %s106]]
    %p108 = scmp.ne.s32.totalorder %s107, 0
    %p109 = scmp.eq.s32.totalorder %s107, 0
    // Predicated region
    $region18: #{tpu_custom_call.1} parent=1 // pred_check
      %p110 = pneg %p109
    $region19: #{tpu_custom_call.1} parent=1 // pred_check_branch
      %112 = sbr.rel (%p110) target = $region21
    $region20: #{tpu_custom_call.1} parent=1 // pred_region
      %113 = vst [vmem:[#allocation7] sm:$0xff] %v84
      %114 = vst [vmem:[#allocation7 + $0x8] sm:$0xff] %v104
    $region21: #{tpu_custom_call.1} parent=1 // pred_fallthru
      _
    // Predicated region
    $region22: #{tpu_custom_call.1} parent=1 // pred_check
      %p115 = pneg %p108
    $region23: #{tpu_custom_call.1} parent=1 // pred_check_branch
      %117 = sbr.rel (%p115) target = $region25
    $region24: #{tpu_custom_call.1} parent=1 // pred_region
      %v118 = vld [vmem:[%s3] sm:$0xff]
      %s119 = smul.u32 0, 256
      %v120 = vlaneseq
      %v121 = vand.u32 %v120, 127
      %v122 = vadd.s32 %v121, 128
      %v123 = vstv %s119
      %v124 = vadd.s32 %v123, %v121
      %v125 = vadd.s32 %v123, %v122
      %126 = vset.pattern.permute.xlu0 0
      %127 = vperm.xlu0 %126, %v118
      %v128 = vpop.permute.xlu0 %127
      %vm129 = vcmp.eq.s32.totalorder %v128, %v124
      %vm130 = vcmp.eq.s32.totalorder %v128, %v125
      %v131 = vmul.f32 %v84, 0.015625
      %v132 = vmul.f32 %v104, 0.015625
      %v133 = vmax.f32 %v131, -1.0
      %v134 = vmax.f32 %v132, -1.0
      %v135 = vmin.f32 %v133, 1.0
      %v136 = vmin.f32 %v134, 1.0
      %v137 = vmul.f32 %v135, %v135
      %v138 = vmul.f32 %v136, %v136
      %v139 = vsub.f32 1.0, %v137
      %v140 = vsub.f32 1.0, %v138
      %v141 = vmax.f32 %v139, 0.0
      %v142 = vmax.f32 %v140, 0.0
      %v143 = vrsqrt.pop %v141
      %v144 = vmul.f32 %v143, %v141
      %v145 = vmul.f32 %v144, %v143
      %v146 = vmul.f32 0.5, %v145
      %v147 = vsub.f32 1.5, %v146
      %v148 = vmul.f32 %v143, %v147
      %v149 = vmul.f32 %v141, %v148
      %vm150 = vcmp.eq.f32.partialorder %v141, inf
      %v151 = vsel %vm150, %v141, %v149
      %vm152 = vcmp.eq.f32.partialorder %v141, 0.0
      %v153 = vand.u32 %v141, 2147483648
      %v154 = vsel %vm152, %v153, %v151
      %v155 = vrsqrt.pop %v142
      %v156 = vmul.f32 %v155, %v142
      %v157 = vmul.f32 %v156, %v155
      %v158 = vmul.f32 0.5, %v157
      %v159 = vsub.f32 1.5, %v158
      %v160 = vmul.f32 %v155, %v159
      %v161 = vmul.f32 %v142, %v160
      %vm162 = vcmp.eq.f32.partialorder %v142, inf
      %v163 = vsel %vm162, %v142, %v161
      %vm164 = vcmp.eq.f32.partialorder %v142, 0.0
      %v165 = vand.u32 %v142, 2147483648
      %v166 = vsel %vm164, %v165, %v163
      %v167 = vmul.f32 %v135, 56.165283
      %v168 = vmul.f32 %v136, 56.165283
      %v169 = vmul.f32 %v154, 30.683235
      %v170 = vmul.f32 %v166, 30.683235
      %v171 = vsub.f32 %v167, %v169
      %v172 = vsub.f32 %v168, %v170
      %v173 = vsel %vm129, %v171, %v84
      %v174 = vsel %vm130, %v172, %v104
      %175 = vst [vmem:[#allocation7] sm:$0xff] %v173
      %176 = vst [vmem:[#allocation7 + $0x8] sm:$0xff] %v174
    $region25: #{tpu_custom_call.1} parent=1 // pred_fallthru
      _
    // Predicated region
    $region26: #{tpu_custom_call.1} parent=1 // pred_check
      _
    $region27: #{tpu_custom_call.1} parent=1 // pred_check_branch
      %178 = sbr.rel (0) target = $region29
    $region28: #{tpu_custom_call.1} parent=1 // pred_region
      %180 = vsyncadd [#allocation6], 0
      %s182 = sshll.u32 [#allocation7], 4
      %s183 = int_to_ptr.vmem [resolvable:$true] %s182
      %s184 = sshll.u32 %s4, 4
      %s185 = int_to_ptr.hbm [resolvable:$true] %s184
      %187 = dma.vmem_to_hbm [thread:$0]  %s183, 256, %s185, [#allocation6]
    $region29: #{tpu_custom_call.1} parent=1 // pred_fallthru
      _
    // Predicated region
    $region30: #{tpu_custom_call.1} parent=1 // pred_check
      _
    $region31: #{tpu_custom_call.1} parent=1 // pred_check_branch
      %189 = sbr.rel (0) target = $region33
    $region32: #{tpu_custom_call.1} parent=1 // pred_region
      %191 = dma.done [#allocation6], 256
    $region33: #{tpu_custom_call.1} parent=1 // pred_fallthru
      _
    %192 = vsyncpa [#allocation5], 1
    %193 = vsyncpa [#allocation6], 1

</llo_original>
